<compile_context>
chip_gen: v5e
topology: v5e:2x2
jax: 0.10.0
libtpu: 0.0.40
codegen_flags: <defaults>
</compile_context>

<pallas_src>
import functools
import math

import jax
import jax.numpy as jnp
from jax.experimental import pallas as pl
from jax.experimental.pallas import tpu as pltpu


# ----------------------------------------------------------------------------
# Bidirectional ClippedGRU kernel: whole sequence, one grid step per direction
# ----------------------------------------------------------------------------
def _bigru_kernel(x_ref, wih_ref, whhzr_ref, whhn_ref, b_ref, h0_ref,
                  *out_refs, clip_value, return_sequence, seq_len, hidden_size):
    if return_sequence:
        out_ref, hn_ref = out_refs
    else:
        (hn_ref,) = out_refs

    T = seq_len
    H = hidden_size
    is_bwd = pl.program_id(0) == 1

    # Weights for this direction (already transposed in the wrapper; no .T here)
    wih = wih_ref[...]          # (D, 3H)   cols ordered [z | r | n]
    whh_zr = whhzr_ref[...]     # (H, 2H)   cols ordered [z | r]
    whh_n = whhn_ref[...]       # (H, H)
    b = b_ref[...]              # (1, 3H)   b_ih + b_hh, ordered [z | r | n]
    b_zr = b[:, :2 * H]
    b_n = b[:, 2 * H:]

    def step(t, h):
        # Backward direction reads (and writes) the time-flipped position, so
        # the per-step output already lands in original time order.
        tt = jnp.where(is_bwd, T - 1 - t, t)
        x_t = x_ref[tt]                                                  # (B, D)

        xw = jnp.dot(x_t, wih, preferred_element_type=jnp.float32)      # (B, 3H)
        hw = jnp.dot(h, whh_zr, preferred_element_type=jnp.float32) + b_zr

        zr = jax.nn.sigmoid(xw[:, :2 * H] + hw)                          # (B, 2H)
        z = zr[:, :H]
        r = zr[:, H:]

        # Matches PyTorch `r * hidden @ W.T + b` == `(r * hidden) @ W.T + b`
        hn_pre = jnp.dot(r * h, whh_n, preferred_element_type=jnp.float32)
        n = jnp.tanh(xw[:, 2 * H:] + hn_pre + b_n)

        h_new = z * h + (1.0 - z) * n
        h_new = jnp.clip(h_new, -clip_value, clip_value)

        if return_sequence:
            out_ref[tt] = h_new
        return h_new

    h_last = jax.lax.fori_loop(0, T, step, h0_ref[...], unroll=True)
    hn_ref[...] = h_last


def run_bigru(x_tbd, h0, p, *, clip_value, return_sequence):
    """Runs a bidirectional ClippedGRU.

    x_tbd: (T, B, D) time-major input (shared by both directions)
    h0:    (2, B, H) initial hidden state per direction
    p:     dict with stacked, pre-transposed weights (see prepare_bigru_params)

    Returns (out, hn) with out: (2, T, B, H) if return_sequence else just
    hn: (2, B, H).
    """
    T, B, D = x_tbd.shape
    H = h0.shape[-1]

    in_specs = [
        pl.BlockSpec((T, B, D), lambda d: (0, 0, 0)),           # x (invariant)
        pl.BlockSpec((None, D, 3 * H), lambda d: (d, 0, 0)),    # W_ih^T
        pl.BlockSpec((None, H, 2 * H), lambda d: (d, 0, 0)),    # W_hh_zr^T
        pl.BlockSpec((None, H, H), lambda d: (d, 0, 0)),        # W_hh_n^T
        pl.BlockSpec((None, 1, 3 * H), lambda d: (d, 0, 0)),    # folded bias
        pl.BlockSpec((None, B, H), lambda d: (d, 0, 0)),        # h0
    ]

    if return_sequence:
        out_shape = (jax.ShapeDtypeStruct((2, T, B, H), jnp.float32),
                     jax.ShapeDtypeStruct((2, B, H), jnp.float32))
        out_specs = (pl.BlockSpec((None, T, B, H), lambda d: (d, 0, 0, 0)),
                     pl.BlockSpec((None, B, H), lambda d: (d, 0, 0)))
    else:
        out_shape = jax.ShapeDtypeStruct((2, B, H), jnp.float32)
        out_specs = pl.BlockSpec((None, B, H), lambda d: (d, 0, 0))

    kernel = functools.partial(_bigru_kernel, clip_value=clip_value,
                               return_sequence=return_sequence,
                               seq_len=T, hidden_size=H)

    result = pl.pallas_call(
        kernel,
        grid=(2,),
        in_specs=in_specs,
        out_specs=out_specs,
        out_shape=out_shape,
        compiler_params=pltpu.CompilerParams(
            dimension_semantics=("parallel",)),   # fwd/bwd independent (v7x 2 TCs)
    )(x_tbd.astype(jnp.float32),
      p["w_ih_t"], p["w_hh_zr_t"], p["w_hh_n_t"], p["b_all"],
      h0.astype(jnp.float32))

    return result


# ----------------------------------------------------------------------------
# IC linear head kernel: fused mean / logvar matmul on concatenated hidden
# ----------------------------------------------------------------------------
def _ic_head_kernel(hn_ref, w_ref, b_ref, mean_ref, std_ref, *, var_min, ic_dim):
    # hn_ref: (2, B, H)  ->  h_cat: (B, 2H)  (concat of fwd / bwd final hidden)
    h_cat = jnp.concatenate([hn_ref[0], hn_ref[1]], axis=-1)
    out = jnp.dot(h_cat, w_ref[...],
                  preferred_element_type=jnp.float32) + b_ref[...]      # (B, 2*ic_dim)
    mean_ref[...] = out[:, :ic_dim]
    logvar = out[:, ic_dim:]
    std_ref[...] = jnp.sqrt(jnp.exp(logvar) + var_min)


def ic_head(hn, w_t, b, *, var_min, ic_dim):
    """hn: (2, B, H); w_t: (2H, 2*ic_dim) pre-transposed; b: (1, 2*ic_dim)."""
    B = hn.shape[1]
    kernel = functools.partial(_ic_head_kernel, var_min=var_min, ic_dim=ic_dim)
    vmem = pl.BlockSpec(memory_space=pltpu.MemorySpace.VMEM)
    mean, std = pl.pallas_call(
        kernel,
        out_shape=(jax.ShapeDtypeStruct((B, ic_dim), jnp.float32),
                   jax.ShapeDtypeStruct((B, ic_dim), jnp.float32)),
        in_specs=[vmem] * 3,
        out_specs=(vmem, vmem),
    )(hn, w_t, b)
    return mean, std


# ----------------------------------------------------------------------------
# Encoder forward (glue around the Pallas kernels)
# ----------------------------------------------------------------------------
def encoder_forward(data, params, hps):
    B, T, _ = data.shape
    assert T == hps["encod_seq_len"]

    # dropout == identity (eval / rate 0)
    # single batch-major -> time-major transpose for the whole forward
    data_tbd = jnp.transpose(data, (1, 0, 2)).astype(jnp.float32)   # (T, B, D)

    sl = hps["ic_enc_seq_len"]
    if sl > 0:
        ic_x = data_tbd[:sl]
        ci_x = data_tbd[sl:]
    else:
        ic_x = data_tbd
        ci_x = data_tbd

    # ---- initial-condition encoder (bidirectional) -> final hidden states only
    ic_h0 = jnp.tile(params["ic_enc_h0"], (1, B, 1))                # (2, B, H)
    hn = run_bigru(ic_x, ic_h0, params["ic_enc"],
                   clip_value=hps["cell_clip"], return_sequence=False)  # (2, B, H)

    ic_mean, ic_std = ic_head(hn, params["ic_w_t"], params["ic_b"],
                              var_min=hps["ic_post_var_min"],
                              ic_dim=hps["ic_dim"])

    # ---- controller-input encoder (bidirectional) -> per-step outputs
    use_con = all([hps["ci_enc_dim"] > 0, hps["con_dim"] > 0, hps["co_dim"] > 0])
    if use_con:
        ci_h0 = jnp.tile(params["ci_enc_h0"], (1, B, 1))
        out_dtbh, _ = run_bigru(ci_x, ci_h0, params["ci_enc"],
                                clip_value=hps["cell_clip"],
                                return_sequence=True)               # (2, Tc, B, H)
        out = jnp.transpose(out_dtbh, (0, 2, 1, 3))                 # (2, B, Tc, H)
        ci_fwd, ci_bwd = out[0], out[1]

        lag = hps["ci_lag"]
        ci_fwd = jnp.pad(ci_fwd, ((0, 0), (lag, 0), (0, 0)))
        ci_bwd = jnp.pad(ci_bwd, ((0, 0), (0, lag), (0, 0)))
        ci_len = hps["encod_seq_len"] - sl
        ci = jnp.concatenate([ci_fwd[:, :ci_len, :], ci_bwd[:, -ci_len:, :]],
                             axis=2)
        fwd_steps = hps["recon_seq_len"] - hps["encod_seq_len"]
        ci = jnp.pad(ci, ((0, 0), (0, fwd_steps), (0, 0)))
        ci = jnp.pad(ci, ((0, 0), (sl, 0), (0, 0)))
    else:
        ci = jnp.zeros((B, hps["recon_seq_len"], 0), data.dtype)

    return ic_mean, ic_std, ci


# ----------------------------------------------------------------------------
# Deterministic parameter init (mirrors the PyTorch init functions) + packing
# ----------------------------------------------------------------------------
def init_gru_params(key, input_size, hidden_size):
    # is_encoder=True -> scale_dim = input_size + hidden_size for both weights
    std = 1.0 / math.sqrt(float(input_size + hidden_size))
    k_ih, k_hh = jax.random.split(key)
    w_ih = jax.random.normal(k_ih, (3 * hidden_size, input_size), jnp.float32) * std
    w_hh = jax.random.normal(k_hh, (3 * hidden_size, hidden_size), jnp.float32) * std
    # bias_ih = ones, last hidden_size entries (the "n" chunk) zeroed; bias_hh = 0
    b_ih = jnp.ones((3 * hidden_size,), jnp.float32).at[-hidden_size:].set(0.0)
    b_hh = jnp.zeros((3 * hidden_size,), jnp.float32)
    return dict(w_ih=w_ih, w_hh=w_hh, b_ih=b_ih, b_hh=b_hh)


def prepare_bigru_params(fwd, bwd, hidden_size):
    """Pack fwd/bwd PyTorch-layout GRU params into kernel layout.

    Kernel layout: pre-transposed, gate-fused, direction-stacked, biases folded.
    """
    H = hidden_size

    def one(p):
        w_ih_t = p["w_ih"].T                    # (D, 3H)   cols [z | r | n]
        w_hh_t = p["w_hh"].T                    # (H, 3H)
        w_hh_zr_t = w_hh_t[:, :2 * H]           # (H, 2H)
        w_hh_n_t = w_hh_t[:, 2 * H:]            # (H, H)
        b_all = (p["b_ih"] + p["b_hh"]).reshape(1, 3 * H)
        return w_ih_t, w_hh_zr_t, w_hh_n_t, b_all

    f = one(fwd)
    b = one(bwd)
    return dict(
        w_ih_t=jnp.stack([f[0], b[0]]),         # (2, D, 3H)
        w_hh_zr_t=jnp.stack([f[1], b[1]]),      # (2, H, 2H)
        w_hh_n_t=jnp.stack([f[2], b[2]]),       # (2, H, H)
        b_all=jnp.stack([f[3], b[3]]),          # (2, 1, 3H)
    )


def init_linear_params(key, in_features, out_features):
    std = 1.0 / math.sqrt(float(in_features))
    w = jax.random.normal(key, (out_features, in_features), jnp.float32) * std
    b = jnp.zeros((out_features,), jnp.float32)
    return w, b


if __name__ == "__main__":
    hps = dict(
        encod_data_dim=4,
        encod_seq_len=8,
        recon_seq_len=10,
        ic_enc_seq_len=2,
        ic_enc_dim=8,
        ic_dim=6,
        ci_enc_dim=8,
        con_dim=4,
        co_dim=2,
        ci_lag=1,
        cell_clip=5.0,
        dropout_rate=0.0,
        ic_post_var_min=1e-4,
    )

    key = jax.random.PRNGKey(0)
    k_data, k_icf, k_icb, k_cif, k_cib, k_lin = jax.random.split(key, 6)

    params = {}
    params["ic_enc_h0"] = jnp.zeros((2, 1, hps["ic_enc_dim"]), jnp.float32)
    params["ci_enc_h0"] = jnp.zeros((2, 1, hps["ci_enc_dim"]), jnp.float32)
    params["ic_enc"] = prepare_bigru_params(
        init_gru_params(k_icf, hps["encod_data_dim"], hps["ic_enc_dim"]),
        init_gru_params(k_icb, hps["encod_data_dim"], hps["ic_enc_dim"]),
        hps["ic_enc_dim"])
    params["ci_enc"] = prepare_bigru_params(
        init_gru_params(k_cif, hps["encod_data_dim"], hps["ci_enc_dim"]),
        init_gru_params(k_cib, hps["encod_data_dim"], hps["ci_enc_dim"]),
        hps["ci_enc_dim"])

    w_lin, b_lin = init_linear_params(k_lin, hps["ic_enc_dim"] * 2,
                                      hps["ic_dim"] * 2)
    params["ic_w_t"] = w_lin.T                    # (2H, 2*ic_dim), pre-transposed
    params["ic_b"] = b_lin.reshape(1, -1)         # (1, 2*ic_dim)

    data = jax.random.normal(
        k_data, (2, hps["encod_seq_len"], hps["encod_data_dim"]), jnp.float32)

    ic_mean, ic_std, ci = encoder_forward(data, params, hps)
    jax.block_until_ready((ic_mean, ic_std, ci))

    assert ic_mean.shape == (2, hps["ic_dim"])
    assert ic_std.shape == (2, hps["ic_dim"])
    assert ci.shape == (2, hps["recon_seq_len"], 2 * hps["ci_enc_dim"])
    print("KERNEL_OK")
</pallas_src>

<mosaic_0001>
module attributes {stable_mosaic.version = 11 : i64} {
  func.func @_bigru_kernel(%arg0: i32, %arg1: memref<2x2x4xf32, #tpu.memory_space<vmem>>, %arg2: memref<1x4x24xf32, #tpu.memory_space<vmem>>, %arg3: memref<1x8x16xf32, #tpu.memory_space<vmem>>, %arg4: memref<1x8x8xf32, #tpu.memory_space<vmem>>, %arg5: memref<1x1x24xf32, #tpu.memory_space<vmem>>, %arg6: memref<1x2x8xf32, #tpu.memory_space<vmem>>, %arg7: memref<1x2x8xf32, #tpu.memory_space<vmem>>) attributes {dimension_semantics = [#tpu.dimension_semantics<parallel>], iteration_bounds = array<i64: 2>, scalar_prefetch = 0 : i64, scratch_operands = 0 : i64, tpu.core_type = #tpu.core_type<tc>, window_params = [{pipeline_mode = #tpu.pipeline_mode<synchronous>, transform_indices = @transform_0, window_bounds = array<i64: 2, 2, 4>}, {transform_indices = @transform_1, window_bounds = array<i64: 1, 4, 24>}, {transform_indices = @transform_2, window_bounds = array<i64: 1, 8, 16>}, {transform_indices = @transform_3, window_bounds = array<i64: 1, 8, 8>}, {transform_indices = @transform_4, window_bounds = array<i64: 1, 1, 24>}, {transform_indices = @transform_5, window_bounds = array<i64: 1, 2, 8>}, {transform_indices = @transform_6, window_bounds = array<i64: 1, 2, 8>}]} {
    %c1_i32 = arith.constant 1 : i32
    %0 = arith.cmpi eq, %arg0, %c1_i32 : i32
    %c0 = arith.constant 0 : index
    %c0_0 = arith.constant 0 : index
    %c0_1 = arith.constant 0 : index
    %1 = vector.load %arg2[%c0, %c0_0, %c0_1] : memref<1x4x24xf32, #tpu.memory_space<vmem>>, vector<1x4x24xf32>
    %2 = vector.shape_cast %1 : vector<1x4x24xf32> to vector<4x24xf32>
    %c0_2 = arith.constant 0 : index
    %c0_3 = arith.constant 0 : index
    %c0_4 = arith.constant 0 : index
    %3 = vector.load %arg3[%c0_2, %c0_3, %c0_4] : memref<1x8x16xf32, #tpu.memory_space<vmem>>, vector<1x8x16xf32>
    %4 = vector.shape_cast %3 : vector<1x8x16xf32> to vector<8x16xf32>
    %c0_5 = arith.constant 0 : index
    %c0_6 = arith.constant 0 : index
    %c0_7 = arith.constant 0 : index
    %5 = vector.load %arg4[%c0_5, %c0_6, %c0_7] : memref<1x8x8xf32, #tpu.memory_space<vmem>>, vector<1x8x8xf32>
    %6 = vector.shape_cast %5 : vector<1x8x8xf32> to vector<8x8xf32>
    %c0_8 = arith.constant 0 : index
    %c0_9 = arith.constant 0 : index
    %c0_10 = arith.constant 0 : index
    %7 = vector.load %arg5[%c0_8, %c0_9, %c0_10] : memref<1x1x24xf32, #tpu.memory_space<vmem>>, vector<1x1x24xf32>
    %8 = vector.shape_cast %7 : vector<1x1x24xf32> to vector<1x24xf32>
    %9 = vector.extract_strided_slice %8 {offsets = [0, 0], sizes = [1, 16], strides = [1, 1]} : vector<1x24xf32> to vector<1x16xf32>
    %10 = vector.extract_strided_slice %8 {offsets = [0, 16], sizes = [1, 8], strides = [1, 1]} : vector<1x24xf32> to vector<1x8xf32>
    %c0_11 = arith.constant 0 : index
    %c0_12 = arith.constant 0 : index
    %c0_13 = arith.constant 0 : index
    %11 = vector.load %arg6[%c0_11, %c0_12, %c0_13] : memref<1x2x8xf32, #tpu.memory_space<vmem>>, vector<1x2x8xf32>
    %12 = vector.shape_cast %11 : vector<1x2x8xf32> to vector<2x8xf32>
    %c0_i32 = arith.constant 0 : i32
    %c1_i32_14 = arith.constant 1 : i32
    %13 = arith.subi %c1_i32_14, %c0_i32 : i32
    %14 = arith.select %0, %13, %c0_i32 : i32
    %15 = arith.index_cast %14 : i32 to index
    %c0_15 = arith.constant 0 : index
    %c0_16 = arith.constant 0 : index
    %16 = vector.load %arg1[%15, %c0_15, %c0_16] : memref<2x2x4xf32, #tpu.memory_space<vmem>>, vector<1x2x4xf32>
    %17 = vector.shape_cast %16 : vector<1x2x4xf32> to vector<2x4xf32>
    %cst = arith.constant dense<0.000000e+00> : vector<2x24xf32>
    %18 = tpu.matmul %17, %2, %cst {dimension_numbers = #tpu.dot_dimension_numbers<[1], [0], [0], [1], [0, 0, 1, 1], [], []>} : vector<2x4xf32>, vector<4x24xf32>, vector<2x24xf32> -> vector<2x24xf32>
    %cst_17 = arith.constant dense<0.000000e+00> : vector<2x16xf32>
    %19 = tpu.matmul %12, %4, %cst_17 {dimension_numbers = #tpu.dot_dimension_numbers<[1], [0], [0], [1], [0, 0, 1, 1], [], []>} : vector<2x8xf32>, vector<8x16xf32>, vector<2x16xf32> -> vector<2x16xf32>
    %20 = vector.broadcast %9 : vector<1x16xf32> to vector<2x16xf32>
    %21 = arith.addf %19, %20 : vector<2x16xf32>
    %22 = vector.extract_strided_slice %18 {offsets = [0, 0], sizes = [2, 16], strides = [1, 1]} : vector<2x24xf32> to vector<2x16xf32>
    %23 = arith.addf %22, %21 : vector<2x16xf32>
    %24 = arith.negf %23 : vector<2x16xf32>
    %25 = math.exp %24 : vector<2x16xf32>
    %cst_18 = arith.constant 1.000000e+00 : f32
    %26 = vector.broadcast %cst_18 : f32 to vector<2x16xf32>
    %27 = arith.addf %26, %25 : vector<2x16xf32>
    %28 = arith.divf %26, %27 : vector<2x16xf32>
    %29 = vector.extract_strided_slice %28 {offsets = [0, 0], sizes = [2, 8], strides = [1, 1]} : vector<2x16xf32> to vector<2x8xf32>
    %30 = vector.extract_strided_slice %28 {offsets = [0, 8], sizes = [2, 8], strides = [1, 1]} : vector<2x16xf32> to vector<2x8xf32>
    %31 = arith.mulf %30, %12 : vector<2x8xf32>
    %cst_19 = arith.constant dense<0.000000e+00> : vector<2x8xf32>
    %32 = tpu.matmul %31, %6, %cst_19 {dimension_numbers = #tpu.dot_dimension_numbers<[1], [0], [0], [1], [0, 0, 1, 1], [], []>} : vector<2x8xf32>, vector<8x8xf32>, vector<2x8xf32> -> vector<2x8xf32>
    %33 = vector.extract_strided_slice %18 {offsets = [0, 16], sizes = [2, 8], strides = [1, 1]} : vector<2x24xf32> to vector<2x8xf32>
    %34 = arith.addf %33, %32 : vector<2x8xf32>
    %35 = vector.broadcast %10 : vector<1x8xf32> to vector<2x8xf32>
    %36 = arith.addf %34, %35 : vector<2x8xf32>
    %37 = math.tanh %36 : vector<2x8xf32>
    %38 = arith.mulf %29, %12 : vector<2x8xf32>
    %cst_20 = arith.constant 1.000000e+00 : f32
    %39 = vector.broadcast %cst_20 : f32 to vector<2x8xf32>
    %40 = arith.subf %39, %29 : vector<2x8xf32>
    %41 = arith.mulf %40, %37 : vector<2x8xf32>
    %42 = arith.addf %38, %41 : vector<2x8xf32>
    %cst_21 = arith.constant -5.000000e+00 : f32
    %cst_22 = arith.constant 5.000000e+00 : f32
    %43 = vector.broadcast %cst_21 : f32 to vector<2x8xf32>
    %44 = arith.maximumf %43, %42 : vector<2x8xf32>
    %45 = vector.broadcast %cst_22 : f32 to vector<2x8xf32>
    %46 = arith.minimumf %45, %44 : vector<2x8xf32>
    %c1_i32_23 = arith.constant 1 : i32
    %c1_i32_24 = arith.constant 1 : i32
    %47 = arith.subi %c1_i32_24, %c1_i32_23 : i32
    %48 = arith.select %0, %47, %c1_i32_23 : i32
    %49 = arith.index_cast %48 : i32 to index
    %c0_25 = arith.constant 0 : index
    %c0_26 = arith.constant 0 : index
    %50 = vector.load %arg1[%49, %c0_25, %c0_26] : memref<2x2x4xf32, #tpu.memory_space<vmem>>, vector<1x2x4xf32>
    %51 = vector.shape_cast %50 : vector<1x2x4xf32> to vector<2x4xf32>
    %cst_27 = arith.constant dense<0.000000e+00> : vector<2x24xf32>
    %52 = tpu.matmul %51, %2, %cst_27 {dimension_numbers = #tpu.dot_dimension_numbers<[1], [0], [0], [1], [0, 0, 1, 1], [], []>} : vector<2x4xf32>, vector<4x24xf32>, vector<2x24xf32> -> vector<2x24xf32>
    %cst_28 = arith.constant dense<0.000000e+00> : vector<2x16xf32>
    %53 = tpu.matmul %46, %4, %cst_28 {dimension_numbers = #tpu.dot_dimension_numbers<[1], [0], [0], [1], [0, 0, 1, 1], [], []>} : vector<2x8xf32>, vector<8x16xf32>, vector<2x16xf32> -> vector<2x16xf32>
    %54 = vector.broadcast %9 : vector<1x16xf32> to vector<2x16xf32>
    %55 = arith.addf %53, %54 : vector<2x16xf32>
    %56 = vector.extract_strided_slice %52 {offsets = [0, 0], sizes = [2, 16], strides = [1, 1]} : vector<2x24xf32> to vector<2x16xf32>
    %57 = arith.addf %56, %55 : vector<2x16xf32>
    %58 = arith.negf %57 : vector<2x16xf32>
    %59 = math.exp %58 : vector<2x16xf32>
    %cst_29 = arith.constant 1.000000e+00 : f32
    %60 = vector.broadcast %cst_29 : f32 to vector<2x16xf32>
    %61 = arith.addf %60, %59 : vector<2x16xf32>
    %62 = arith.divf %60, %61 : vector<2x16xf32>
    %63 = vector.extract_strided_slice %62 {offsets = [0, 0], sizes = [2, 8], strides = [1, 1]} : vector<2x16xf32> to vector<2x8xf32>
    %64 = vector.extract_strided_slice %62 {offsets = [0, 8], sizes = [2, 8], strides = [1, 1]} : vector<2x16xf32> to vector<2x8xf32>
    %65 = arith.mulf %64, %46 : vector<2x8xf32>
    %cst_30 = arith.constant dense<0.000000e+00> : vector<2x8xf32>
    %66 = tpu.matmul %65, %6, %cst_30 {dimension_numbers = #tpu.dot_dimension_numbers<[1], [0], [0], [1], [0, 0, 1, 1], [], []>} : vector<2x8xf32>, vector<8x8xf32>, vector<2x8xf32> -> vector<2x8xf32>
    %67 = vector.extract_strided_slice %52 {offsets = [0, 16], sizes = [2, 8], strides = [1, 1]} : vector<2x24xf32> to vector<2x8xf32>
    %68 = arith.addf %67, %66 : vector<2x8xf32>
    %69 = vector.broadcast %10 : vector<1x8xf32> to vector<2x8xf32>
    %70 = arith.addf %68, %69 : vector<2x8xf32>
    %71 = math.tanh %70 : vector<2x8xf32>
    %72 = arith.mulf %63, %46 : vector<2x8xf32>
    %cst_31 = arith.constant 1.000000e+00 : f32
    %73 = vector.broadcast %cst_31 : f32 to vector<2x8xf32>
    %74 = arith.subf %73, %63 : vector<2x8xf32>
    %75 = arith.mulf %74, %71 : vector<2x8xf32>
    %76 = arith.addf %72, %75 : vector<2x8xf32>
    %cst_32 = arith.constant -5.000000e+00 : f32
    %cst_33 = arith.constant 5.000000e+00 : f32
    %77 = vector.broadcast %cst_32 : f32 to vector<2x8xf32>
    %78 = arith.maximumf %77, %76 : vector<2x8xf32>
    %79 = vector.broadcast %cst_33 : f32 to vector<2x8xf32>
    %80 = arith.minimumf %79, %78 : vector<2x8xf32>
    %c2_i32 = arith.constant 2 : i32
    %c0_34 = arith.constant 0 : index
    %c0_35 = arith.constant 0 : index
    %c0_36 = arith.constant 0 : index
    %81 = vector.load %arg7[%c0_34, %c0_35, %c0_36] : memref<1x2x8xf32, #tpu.memory_space<vmem>>, vector<1x2x8xf32>
    %82 = vector.shape_cast %81 : vector<1x2x8xf32> to vector<2x8xf32>
    %83 = vector.shape_cast %80 : vector<2x8xf32> to vector<1x2x8xf32>
    tpu.vector_store %arg7[%c0_34, %c0_35, %c0_36], %83 {strides = array<i32>} : memref<1x2x8xf32, #tpu.memory_space<vmem>>, vector<1x2x8xf32>,
    return
  }
  func.func @transform_0(%arg0: i32) -> (i32, i32, i32) {
    %c0_i32 = arith.constant 0 : i32
    %c0_i32_0 = arith.constant 0 : i32
    %c0_i32_1 = arith.constant 0 : i32
    %c0_i32_2 = arith.constant 0 : i32
    return %c0_i32, %c0_i32_0, %c0_i32_1 : i32, i32, i32
  }
  func.func @transform_1(%arg0: i32) -> (i32, i32, i32) {
    %c0_i32 = arith.constant 0 : i32
    %c0_i32_0 = arith.constant 0 : i32
    %c0_i32_1 = arith.constant 0 : i32
    return %arg0, %c0_i32, %c0_i32_0 : i32, i32, i32
  }
  func.func @transform_2(%arg0: i32) -> (i32, i32, i32) {
    %c0_i32 = arith.constant 0 : i32
    %c0_i32_0 = arith.constant 0 : i32
    %c0_i32_1 = arith.constant 0 : i32
    return %arg0, %c0_i32, %c0_i32_0 : i32, i32, i32
  }
  func.func @transform_3(%arg0: i32) -> (i32, i32, i32) {
    %c0_i32 = arith.constant 0 : i32
    %c0_i32_0 = arith.constant 0 : i32
    %c0_i32_1 = arith.constant 0 : i32
    return %arg0, %c0_i32, %c0_i32_0 : i32, i32, i32
  }
  func.func @transform_4(%arg0: i32) -> (i32, i32, i32) {
    %c0_i32 = arith.constant 0 : i32
    %c0_i32_0 = arith.constant 0 : i32
    %c0_i32_1 = arith.constant 0 : i32
    return %arg0, %c0_i32, %c0_i32_0 : i32, i32, i32
  }
  func.func @transform_5(%arg0: i32) -> (i32, i32, i32) {
    %c0_i32 = arith.constant 0 : i32
    %c0_i32_0 = arith.constant 0 : i32
    %c0_i32_1 = arith.constant 0 : i32
    return %arg0, %c0_i32, %c0_i32_0 : i32, i32, i32
  }
  func.func @transform_6(%arg0: i32) -> (i32, i32, i32) {
    %c0_i32 = arith.constant 0 : i32
    %c0_i32_0 = arith.constant 0 : i32
    %c0_i32_1 = arith.constant 0 : i32
    return %arg0, %c0_i32, %c0_i32_0 : i32, i32, i32
  }
}

</mosaic_0001>

<llo_original>
// kernel: tpu_custom_call.1
$region0: #{tpu_custom_call.1}
  #allocation0 [shape = 'u32[]', space=smem, size = 0x4, offset = 0x4, fixed_abs, tag = 'smem constant byte address 0x4 - core index']
  #allocation1 [shape = 'u32[72,128]{1,0:T(1,128)}', space=vmem, size = 0x9000, scoped, tag = 'internal scratch']
  %s0 = inlined_call_operand.hbm [shape: f32[2,2,4], index: 0, kind: input, shape index: {}]
  %s1 = inlined_call_operand.hbm [shape: f32[2,4,24], index: 1, kind: input, shape index: {}]
  %s2 = inlined_call_operand.hbm [shape: f32[2,8,16], index: 2, kind: input, shape index: {}]
  %s3 = inlined_call_operand.hbm [shape: f32[2,8,8], index: 3, kind: input, shape index: {}]
  %s4 = inlined_call_operand.hbm [shape: f32[2,1,24], index: 4, kind: input, shape index: {}]
  %s5 = inlined_call_operand.vmem [shape: f32[2,2,8], index: 5, kind: input, shape index: {}]
  %s6 = inlined_call_operand.hbm [shape: f32[2,2,8], index: 6, kind: output, shape index: {}]
  %s7 = sld [smem:[#allocation0]]
  $region77: #{tpu_custom_call.1} parent=0
    _
  %s9 = ssub.s32 1, %s7
  %s10 = scalar_select 0, %s9, %s7
  $region1: #{tpu_custom_call.1} parent=0
    #allocation2 [shape = 'u8[2048]{0}', space=vmem, size = 0x800, scoped, tag = 'input window, operand 0, single buffered']
    #allocation3 [shape = 's32[2]{0}', space=sflag, size = 0x8, scoped, tag = 'scoped memory for tpu_custom_call.1']
    #allocation4 [shape = 's32[2]{0}', space=sflag, size = 0x8, scoped, tag = 'scoped memory for tpu_custom_call.1']
    #allocation5 [shape = 'u8[4096]{0}', space=vmem, size = 0x1000, scoped, tag = 'input window, operand 1']
    #allocation6 [shape = 's32[2]{0}', space=sflag, size = 0x8, scoped, tag = 'scoped memory for tpu_custom_call.1']
    #allocation7 [shape = 'u8[8192]{0}', space=vmem, size = 0x2000, scoped, tag = 'input window, operand 2']
    #allocation8 [shape = 'u8[8192]{0}', space=vmem, size = 0x2000, scoped, tag = 'input window, operand 3']
    #allocation9 [shape = 's32[2]{0}', space=sflag, size = 0x8, scoped, tag = 'scoped memory for tpu_custom_call.1']
    #allocation10 [shape = 'u8[1024]{0}', space=vmem, size = 0x400, scoped, tag = 'input window, operand 4']
    #allocation11 [shape = 'u8[2048]{0}', space=vmem, size = 0x800, scoped, tag = 'output window, operand 0']
    %11 = vsyncpa [#allocation3], 0
    %12 = vsyncpa [#allocation6], 0
    %s13 = scalar_lea.sflag [#allocation6], 1
    %14 = vsyncpa %s13, 0
    %15 = vsyncpa [#allocation9], 0
    %s16 = scalar_lea.sflag [#allocation9], 1
    %17 = vsyncpa %s16, 0
    %18 = vsyncpa [#allocation4], 0
    %s19 = scalar_lea.sflag [#allocation4], 1
    %20 = vsyncpa %s19, 0
    loop: start=0, step=1, limit=4
    $region2: #{tpu_custom_call.1} parent=1 // loop_pre_header
      _
    $region3: #{tpu_custom_call.1} parent=1 // loop_header
      %s22 = sphi 0, %s26
      %p23 = scmp.ge.s32.totalorder %s22, 4
      %s30 = sphi 0, %s30
      %s32 = sphi 0, %s30
      %s33 = sphi 0, %s32
      %s47 = sphi 0, %s33
      %s53 = sphi 0, %s55
      %s56 = sphi 0, %s53
      %s57 = sphi 0, %s56
      %s73 = sphi 0, %s57
      %s79 = sphi 0, %s81
      %s82 = sphi 0, %s79
      %s83 = sphi 0, %s82
      %s99 = sphi 0, %s83
      %s105 = sphi 0, %s107
      %s108 = sphi 0, %s105
      %s109 = sphi 0, %s108
      %s125 = sphi 0, %s109
      %s131 = sphi 0, %s133
      %s134 = sphi 0, %s131
      %s135 = sphi 0, %s134
      %s151 = sphi 0, %s135
      %s157 = sphi 0, %s159
      %s160 = sphi 0, %s157
      %s161 = sphi 0, %s160
      %s177 = sphi 0, %s161
      %s183 = sphi 0, %s185
      %s186 = sphi 0, %s183
      %s187 = sphi 0, %s186
      %s203 = sphi 0, %s187
    $region4: #{tpu_custom_call.1} parent=1 // loop_header_branch
      %25 = sbr.rel (%p23) target = $region8
    $region5: #{tpu_custom_call.1} parent=1 // loop_body
      %s27 = ssub.s32 %s22, 1
      %s28 = ssub.s32 %s22, 2
      %s29 = sadd.s32 %s22, 1
      %s31 = sadd.s32 %s30, 1
      %p34 = scmp.eq.s32.totalorder %s22, 1
      %p35 = scmp.ne.s32.totalorder %s30, %s32
      %p36 = scmp.eq.s32.totalorder %s22, 0
      %p37 = por %p35, %p36
      %p38 = scmp.ne.s32.totalorder %s30, %s32
      %p39 = scmp.eq.s32.totalorder %s27, 1
      %p40 = por %p38, %p39
      %p41 = scmp.ne.s32.totalorder %s32, %s33
      %p42 = scmp.eq.s32.totalorder %s27, 0
      %p43 = por %p41, %p42
      %p44 = scmp.ne.s32.totalorder %s32, %s33
      %p45 = scmp.eq.s32.totalorder %s28, 1
      %p46 = por %p44, %p45
      %p48 = scmp.ne.s32.totalorder %s33, %s47
      %p49 = scmp.eq.s32.totalorder %s28, 0
      %p50 = por %p48, %p49
      %s51 = ssub.s32 %s22, %s29
      %p52 = scmp.eq.s32.totalorder %s51, 0
      %s54 = sadd.s32 %s53, 1
      %s55 = scalar_select %p52, %s53, %s54
      %p58 = pneg %p52
      %p59 = scmp.eq.s32.totalorder %s22, 1
      %p60 = por %p58, %p59
      %p61 = scmp.ne.s32.totalorder %s53, %s56
      %p62 = scmp.eq.s32.totalorder %s22, 0
      %p63 = por %p61, %p62
      %p64 = scmp.ne.s32.totalorder %s53, %s56
      %p65 = scmp.eq.s32.totalorder %s27, 1
      %p66 = por %p64, %p65
      %p67 = scmp.ne.s32.totalorder %s56, %s57
      %p68 = scmp.eq.s32.totalorder %s27, 0
      %p69 = por %p67, %p68
      %p70 = scmp.ne.s32.totalorder %s56, %s57
      %p71 = scmp.eq.s32.totalorder %s28, 1
      %p72 = por %p70, %p71
      %p74 = scmp.ne.s32.totalorder %s57, %s73
      %p75 = scmp.eq.s32.totalorder %s28, 0
      %p76 = por %p74, %p75
      %s77 = ssub.s32 %s22, %s29
      %p78 = scmp.eq.s32.totalorder %s77, 0
      %s80 = sadd.s32 %s79, 1
      %s81 = scalar_select %p78, %s79, %s80
      %p84 = pneg %p78
      %p85 = scmp.eq.s32.totalorder %s22, 1
      %p86 = por %p84, %p85
      %p87 = scmp.ne.s32.totalorder %s79, %s82
      %p88 = scmp.eq.s32.totalorder %s22, 0
      %p89 = por %p87, %p88
      %p90 = scmp.ne.s32.totalorder %s79, %s82
      %p91 = scmp.eq.s32.totalorder %s27, 1
      %p92 = por %p90, %p91
      %p93 = scmp.ne.s32.totalorder %s82, %s83
      %p94 = scmp.eq.s32.totalorder %s27, 0
      %p95 = por %p93, %p94
      %p96 = scmp.ne.s32.totalorder %s82, %s83
      %p97 = scmp.eq.s32.totalorder %s28, 1
      %p98 = por %p96, %p97
      %p100 = scmp.ne.s32.totalorder %s83, %s99
      %p101 = scmp.eq.s32.totalorder %s28, 0
      %p102 = por %p100, %p101
      %s103 = ssub.s32 %s22, %s29
      %p104 = scmp.eq.s32.totalorder %s103, 0
      %s106 = sadd.s32 %s105, 1
      %s107 = scalar_select %p104, %s105, %s106
      %p110 = pneg %p104
      %p111 = scmp.eq.s32.totalorder %s22, 1
      %p112 = por %p110, %p111
      %p113 = scmp.ne.s32.totalorder %s105, %s108
      %p114 = scmp.eq.s32.totalorder %s22, 0
      %p115 = por %p113, %p114
      %p116 = scmp.ne.s32.totalorder %s105, %s108
      %p117 = scmp.eq.s32.totalorder %s27, 1
      %p118 = por %p116, %p117
      %p119 = scmp.ne.s32.totalorder %s108, %s109
      %p120 = scmp.eq.s32.totalorder %s27, 0
      %p121 = por %p119, %p120
      %p122 = scmp.ne.s32.totalorder %s108, %s109
      %p123 = scmp.eq.s32.totalorder %s28, 1
      %p124 = por %p122, %p123
      %p126 = scmp.ne.s32.totalorder %s109, %s125
      %p127 = scmp.eq.s32.totalorder %s28, 0
      %p128 = por %p126, %p127
      %s129 = ssub.s32 %s22, %s29
      %p130 = scmp.eq.s32.totalorder %s129, 0
      %s132 = sadd.s32 %s131, 1
      %s133 = scalar_select %p130, %s131, %s132
      %p136 = pneg %p130
      %p137 = scmp.eq.s32.totalorder %s22, 1
      %p138 = por %p136, %p137
      %p139 = scmp.ne.s32.totalorder %s131, %s134
      %p140 = scmp.eq.s32.totalorder %s22, 0
      %p141 = por %p139, %p140
      %p142 = scmp.ne.s32.totalorder %s131, %s134
      %p143 = scmp.eq.s32.totalorder %s27, 1
      %p144 = por %p142, %p143
      %p145 = scmp.ne.s32.totalorder %s134, %s135
      %p146 = scmp.eq.s32.totalorder %s27, 0
      %p147 = por %p145, %p146
      %p148 = scmp.ne.s32.totalorder %s134, %s135
      %p149 = scmp.eq.s32.totalorder %s28, 1
      %p150 = por %p148, %p149
      %p152 = scmp.ne.s32.totalorder %s135, %s151
      %p153 = scmp.eq.s32.totalorder %s28, 0
      %p154 = por %p152, %p153
      %s155 = ssub.s32 %s22, %s29
      %p156 = scmp.eq.s32.totalorder %s155, 0
      %s158 = sadd.s32 %s157, 1
      %s159 = scalar_select %p156, %s157, %s158
      %p162 = pneg %p156
      %p163 = scmp.eq.s32.totalorder %s22, 1
      %p164 = por %p162, %p163
      %p165 = scmp.ne.s32.totalorder %s157, %s160
      %p166 = scmp.eq.s32.totalorder %s22, 0
      %p167 = por %p165, %p166
      %p168 = scmp.ne.s32.totalorder %s157, %s160
      %p169 = scmp.eq.s32.totalorder %s27, 1
      %p170 = por %p168, %p169
      %p171 = scmp.ne.s32.totalorder %s160, %s161
      %p172 = scmp.eq.s32.totalorder %s27, 0
      %p173 = por %p171, %p172
      %p174 = scmp.ne.s32.totalorder %s160, %s161
      %p175 = scmp.eq.s32.totalorder %s28, 1
      %p176 = por %p174, %p175
      %p178 = scmp.ne.s32.totalorder %s161, %s177
      %p179 = scmp.eq.s32.totalorder %s28, 0
      %p180 = por %p178, %p179
      %s181 = ssub.s32 %s22, %s29
      %p182 = scmp.eq.s32.totalorder %s181, 0
      %s184 = sadd.s32 %s183, 1
      %s185 = scalar_select %p182, %s183, %s184
      %p188 = pneg %p182
      %p189 = scmp.eq.s32.totalorder %s22, 1
      %p190 = por %p188, %p189
      %p191 = scmp.ne.s32.totalorder %s183, %s186
      %p192 = scmp.eq.s32.totalorder %s22, 0
      %p193 = por %p191, %p192
      %p194 = scmp.ne.s32.totalorder %s183, %s186
      %p195 = scmp.eq.s32.totalorder %s27, 1
      %p196 = por %p194, %p195
      %p197 = scmp.ne.s32.totalorder %s186, %s187
      %p198 = scmp.eq.s32.totalorder %s27, 0
      %p199 = por %p197, %p198
      %p200 = scmp.ne.s32.totalorder %s186, %s187
      %p201 = scmp.eq.s32.totalorder %s28, 1
      %p202 = por %p200, %p201
      %p204 = scmp.ne.s32.totalorder %s187, %s203
      %p205 = scmp.eq.s32.totalorder %s28, 0
      %p206 = por %p204, %p205
      %p207 = scmp.le.s32.totalorder 1, %s22
      %p208 = scmp.lt.s32.totalorder %s22, 3
      %p209 = pnand %p207, %p208
      %p210 = pneg %p209
      // Predicated region
      $region9: #{tpu_custom_call.1} parent=5 // pred_check
        _
      $region10: #{tpu_custom_call.1} parent=5 // pred_check_branch
        %212 = sbr.rel (%p209) target = $region12
      $region11: #{tpu_custom_call.1} parent=5 // pred_region
        %s213 = ssub.s32 %s22, 1
        // Predicated region
        $region13: #{tpu_custom_call.1} parent=11 // pred_check
          %p214 = pneg %p43
        $region14: #{tpu_custom_call.1} parent=11 // pred_check_branch
          %216 = sbr.rel (%p214) target = $region16
        $region15: #{tpu_custom_call.1} parent=11 // pred_region
          %218 = vsyncadd [#allocation3], 0
          %s219 = sshll.u32 %s0, 4
          %s220 = int_to_ptr.hbm [resolvable:$true] %s219
          %s221 = sshll.u32 [#allocation2], 4
          %s222 = int_to_ptr.vmem [resolvable:$true] %s221
          %227 = dma.hbm_to_vmem [thread:$0]  %s220, 64, %s222, [#allocation3], 32, 32, 2
        $region16: #{tpu_custom_call.1} parent=11 // pred_fallthru
          _
      $region12: #{tpu_custom_call.1} parent=5 // pred_fallthru
        _
      %p228 = scmp.lt.s32.totalorder %s22, 2
      // Predicated region
      $region17: #{tpu_custom_call.1} parent=5 // pred_check
        %p229 = pneg %p228
      $region18: #{tpu_custom_call.1} parent=5 // pred_check_branch
        %231 = sbr.rel (%p229) target = $region20
      $region19: #{tpu_custom_call.1} parent=5 // pred_region
        // Predicated region
        $region21: #{tpu_custom_call.1} parent=19 // pred_check
          %p232 = pneg %p63
        $region22: #{tpu_custom_call.1} parent=19 // pred_check_branch
          %234 = sbr.rel (%p232) target = $region24
        $region23: #{tpu_custom_call.1} parent=19 // pred_region
          %s235 = sand.u32 %s22, 1
          %s236 = scalar_lea.sflag [#allocation6], %s235
          %s237 = sand.u32 %s53, 1
          %s238 = smul.addr %s237, 4
          %s239 = scalar_lea.vmem [#allocation5], %s238
          %241 = vsyncadd %s236, 0
          %s242 = smul.addr %s22, 4
          %s243 = scalar_lea.hbm %s1, %s242
          %s245 = sshll.u32 %s243, 4
          %s246 = int_to_ptr.hbm [resolvable:$true] %s245
          %s247 = sshll.u32 %s239, 4
          %s248 = int_to_ptr.vmem [resolvable:$true] %s247
          %250 = dma.hbm_to_vmem [thread:$0]  %s246, 64, %s248, %s236
        $region24: #{tpu_custom_call.1} parent=19 // pred_fallthru
          _
        // Predicated region
        $region25: #{tpu_custom_call.1} parent=19 // pred_check
          %p251 = pneg %p89
        $region26: #{tpu_custom_call.1} parent=19 // pred_check_branch
          %253 = sbr.rel (%p251) target = $region28
        $region27: #{tpu_custom_call.1} parent=19 // pred_region
          %s254 = sand.u32 %s22, 1
          %s255 = scalar_lea.sflag [#allocation6], %s254
          %s256 = sand.u32 %s79, 1
          %s257 = smul.addr %s256, 8
          %s258 = scalar_lea.vmem [#allocation7], %s257
          %260 = vsyncadd %s255, 0
          %s261 = smul.addr %s22, 8
          %s262 = scalar_lea.hbm %s2, %s261
          %s264 = sshll.u32 %s262, 4
          %s265 = int_to_ptr.hbm [resolvable:$true] %s264
          %s266 = sshll.u32 %s258, 4
          %s267 = int_to_ptr.vmem [resolvable:$true] %s266
          %269 = dma.hbm_to_vmem [thread:$0]  %s265, 128, %s267, %s255
        $region28: #{tpu_custom_call.1} parent=19 // pred_fallthru
          _
        // Predicated region
        $region29: #{tpu_custom_call.1} parent=19 // pred_check
          %p270 = pneg %p115
        $region30: #{tpu_custom_call.1} parent=19 // pred_check_branch
          %272 = sbr.rel (%p270) target = $region32
        $region31: #{tpu_custom_call.1} parent=19 // pred_region
          %s273 = sand.u32 %s22, 1
          %s274 = scalar_lea.sflag [#allocation9], %s273
          %s275 = sand.u32 %s105, 1
          %s276 = smul.addr %s275, 8
          %s277 = scalar_lea.vmem [#allocation8], %s276
          %279 = vsyncadd %s274, 0
          %s280 = smul.addr %s22, 8
          %s281 = scalar_lea.hbm %s3, %s280
          %s283 = sshll.u32 %s281, 4
          %s284 = int_to_ptr.hbm [resolvable:$true] %s283
          %s285 = sshll.u32 %s277, 4
          %s286 = int_to_ptr.vmem [resolvable:$true] %s285
          %288 = dma.hbm_to_vmem [thread:$0]  %s284, 128, %s286, %s274
        $region32: #{tpu_custom_call.1} parent=19 // pred_fallthru
          _
        // Predicated region
        $region33: #{tpu_custom_call.1} parent=19 // pred_check
          %p289 = pneg %p141
        $region34: #{tpu_custom_call.1} parent=19 // pred_check_branch
          %291 = sbr.rel (%p289) target = $region36
        $region35: #{tpu_custom_call.1} parent=19 // pred_region
          %s292 = sand.u32 %s22, 1
          %s293 = scalar_lea.sflag [#allocation9], %s292
          %s294 = sand.u32 %s131, 1
          %s295 = scalar_lea.vmem [#allocation10], %s294
          %297 = vsyncadd %s293, 0
          %s298 = scalar_lea.hbm %s4, %s22
          %s300 = sshll.u32 %s298, 4
          %s301 = int_to_ptr.hbm [resolvable:$true] %s300
          %s302 = sshll.u32 %s295, 4
          %s303 = int_to_ptr.vmem [resolvable:$true] %s302
          %305 = dma.hbm_to_vmem [thread:$0]  %s301, 16, %s303, %s293
        $region36: #{tpu_custom_call.1} parent=19 // pred_fallthru
          _
        // Predicated region
        $region37: #{tpu_custom_call.1} parent=19 // pred_check
          %p306 = pneg %p167
        $region38: #{tpu_custom_call.1} parent=19 // pred_check_branch
          %308 = sbr.rel (%p306) target = $region40
        $region39: #{tpu_custom_call.1} parent=19 // pred_region
          %p309 = scmp.lt.s32.totalorder %s22, 1
          %s310 = scalar_select %p309, %s22, 1
          %s311 = smul.addr %s310, 2
          %s312 = scalar_lea.vmem %s5, %s311
        $region40: #{tpu_custom_call.1} parent=19 // pred_fallthru
          _
      $region20: #{tpu_custom_call.1} parent=5 // pred_fallthru
        _
      %p313 = scmp.le.s32.totalorder 1, %s22
      %p314 = scmp.lt.s32.totalorder %s22, 3
      %p315 = pnand %p313, %p314
      %p316 = pneg %p315
      // Predicated region
      $region41: #{tpu_custom_call.1} parent=5 // pred_check
        _
      $region42: #{tpu_custom_call.1} parent=5 // pred_check_branch
        %318 = sbr.rel (%p315) target = $region44
      $region43: #{tpu_custom_call.1} parent=5 // pred_region
        %s319 = ssub.s32 %s22, 1
        // Predicated region
        $region45: #{tpu_custom_call.1} parent=43 // pred_check
          %p320 = pneg %p43
        $region46: #{tpu_custom_call.1} parent=43 // pred_check_branch
          %322 = sbr.rel (%p320) target = $region48
        $region47: #{tpu_custom_call.1} parent=43 // pred_region
          %324 = dma.done [#allocation3], 64
        $region48: #{tpu_custom_call.1} parent=43 // pred_fallthru
          _
        %s325 = sand.u32 %s27, 1
        %s326 = scalar_lea.sflag [#allocation6], %s325
        %s327 = sand.u32 %s56, 1
        %s328 = smul.addr %s327, 4
        %s329 = scalar_lea.vmem [#allocation5], %s328
        // Predicated region
        $region49: #{tpu_custom_call.1} parent=43 // pred_check
          %p330 = pneg %p69
        $region50: #{tpu_custom_call.1} parent=43 // pred_check_branch
          %332 = sbr.rel (%p330) target = $region52
        $region51: #{tpu_custom_call.1} parent=43 // pred_region
          %334 = dma.done %s326, 64
        $region52: #{tpu_custom_call.1} parent=43 // pred_fallthru
          _
        %s335 = sand.u32 %s27, 1
        %s336 = scalar_lea.sflag [#allocation6], %s335
        %s337 = sand.u32 %s82, 1
        %s338 = smul.addr %s337, 8
        %s339 = scalar_lea.vmem [#allocation7], %s338
        // Predicated region
        $region53: #{tpu_custom_call.1} parent=43 // pred_check
          %p340 = pneg %p95
        $region54: #{tpu_custom_call.1} parent=43 // pred_check_branch
          %342 = sbr.rel (%p340) target = $region56
        $region55: #{tpu_custom_call.1} parent=43 // pred_region
          %344 = dma.done %s336, 128
        $region56: #{tpu_custom_call.1} parent=43 // pred_fallthru
          _
        %s345 = sand.u32 %s27, 1
        %s346 = scalar_lea.sflag [#allocation9], %s345
        %s347 = sand.u32 %s108, 1
        %s348 = smul.addr %s347, 8
        %s349 = scalar_lea.vmem [#allocation8], %s348
        // Predicated region
        $region57: #{tpu_custom_call.1} parent=43 // pred_check
          %p350 = pneg %p121
        $region58: #{tpu_custom_call.1} parent=43 // pred_check_branch
          %352 = sbr.rel (%p350) target = $region60
        $region59: #{tpu_custom_call.1} parent=43 // pred_region
          %354 = dma.done %s346, 128
        $region60: #{tpu_custom_call.1} parent=43 // pred_fallthru
          _
        %s355 = sand.u32 %s27, 1
        %s356 = scalar_lea.sflag [#allocation9], %s355
        %s357 = sand.u32 %s134, 1
        %s358 = scalar_lea.vmem [#allocation10], %s357
        // Predicated region
        $region61: #{tpu_custom_call.1} parent=43 // pred_check
          %p359 = pneg %p147
        $region62: #{tpu_custom_call.1} parent=43 // pred_check_branch
          %361 = sbr.rel (%p359) target = $region64
        $region63: #{tpu_custom_call.1} parent=43 // pred_region
          %363 = dma.done %s356, 16
        $region64: #{tpu_custom_call.1} parent=43 // pred_fallthru
          _
        %p364 = pneg %p43
        %p365 = pneg %p40
        %s366 = sand.u32 %s27, 1
        %s367 = scalar_lea.sflag [#allocation6], %s366
        %s368 = sand.u32 %s56, 1
        %s369 = smul.addr %s368, 4
        %s370 = scalar_lea.vmem [#allocation5], %s369
        %p371 = pneg %p69
        %p372 = pneg %p66
        %s373 = sand.u32 %s27, 1
        %s374 = scalar_lea.sflag [#allocation6], %s373
        %s375 = sand.u32 %s82, 1
        %s376 = smul.addr %s375, 8
        %s377 = scalar_lea.vmem [#allocation7], %s376
        %p378 = pneg %p95
        %p379 = pneg %p92
        %s380 = sand.u32 %s27, 1
        %s381 = scalar_lea.sflag [#allocation9], %s380
        %s382 = sand.u32 %s108, 1
        %s383 = smul.addr %s382, 8
        %s384 = scalar_lea.vmem [#allocation8], %s383
        %p385 = pneg %p121
        %p386 = pneg %p118
        %s387 = sand.u32 %s27, 1
        %s388 = scalar_lea.sflag [#allocation9], %s387
        %s389 = sand.u32 %s134, 1
        %s390 = scalar_lea.vmem [#allocation10], %s389
        %p391 = pneg %p147
        %p392 = pneg %p144
        %p393 = scmp.lt.s32.totalorder %s27, 1
        %s394 = scalar_select %p393, %s27, 1
        %s395 = smul.addr %s394, 2
        %s396 = scalar_lea.vmem %s5, %s395
        %p397 = pneg %p173
        %p398 = pneg %p170
        %p399 = pneg %p199
        %p400 = pneg %p196
        %s401 = sand.u32 %s186, 1
        %s402 = scalar_lea.sflag [#allocation4], %s401
        %s403 = sand.u32 %s186, 1
        %s404 = smul.addr %s403, 2
        %s405 = scalar_lea.vmem [#allocation11], %s404
        %p406 = scmp.lt.s32.totalorder %s27, 1
        %s407 = scalar_select %p406, %s27, 1
        %s408 = smul.addr %s407, 2
        %s409 = scalar_lea.vmem %s5, %s408
        %p410 = scmp.eq.s32.totalorder %s27, 1
        %v411 = vld [vmem:[%s329] sm:$0xf]
        %v412 = vld [vmem:[%s339] sm:$0xff]
        %v413 = vld [vmem:[%s349] sm:$0xff]
        %v414 = vld [vmem:[%s358] sm:$0x1]
        %v415 = vld [vmem:[%s409] sm:$0x3]
        %s416 = scalar_select %p410, 1, 0
        %s417 = smul.u32 %s416, 2
        %s418 = scalar_lea.vmem [#allocation2], %s417
        %v419 = vld [vmem:[%s418] sm:$0x3]
        %vm420 = vcmask 31744
        %v422 = vsel %vm420, %v419, 0
        %vm424 = vcmask 1043456
        %v426 = vsel %vm424, %v411, 0
        %428 = vmatpush.msra.mxu0 0.0
        %429 = vmatpush.msra.mxu0 0.0
        %430 = vmatpush.msra.mxu0 0.0
        %431 = vmatpush.msra.mxu0 0.0
        %432 = vmatpush.msra.mxu0 0.0
        %433 = vmatpush.msra.mxu0 0.0
        %434 = vmatpush.msra.mxu0 0.0
        %435 = vmatpush.msra.mxu0 0.0
        %436 = vmatpush.msra.mxu0 0.0
        %437 = vmatpush.msra.mxu0 0.0
        %438 = vmatpush.msra.mxu0 0.0
        %439 = vmatpush.msra.mxu0 0.0
        %440 = vmatpush.msra.mxu0 0.0
        %441 = vmatpush.msra.mxu0 0.0
        %442 = vmatpush.msra.mxu0 0.0
        %443 = vmatpush.msra.mxu0 %v426
        %444 = vmatmul.f32.gmra.mxu0 %v422
        %v445 = vpop.f32.mrf.mxu0
        %v446 = vadd.f32 0.0, %v445
        %447 = vdwg.mxu0
        %v449 = vperm.slane %v414, 0
        %vm451 = vcmask 64512
        %v453 = vsel %vm451, %v415, 0
        %455 = vmatpush.msra.mxu0 0.0
        %456 = vmatpush.msra.mxu0 0.0
        %457 = vmatpush.msra.mxu0 0.0
        %458 = vmatpush.msra.mxu0 0.0
        %459 = vmatpush.msra.mxu0 0.0
        %460 = vmatpush.msra.mxu0 0.0
        %461 = vmatpush.msra.mxu0 0.0
        %462 = vmatpush.msra.mxu0 0.0
        %463 = vmatpush.msra.mxu0 0.0
        %464 = vmatpush.msra.mxu0 0.0
        %465 = vmatpush.msra.mxu0 0.0
        %466 = vmatpush.msra.mxu0 0.0
        %467 = vmatpush.msra.mxu0 0.0
        %468 = vmatpush.msra.mxu0 0.0
        %469 = vmatpush.msra.mxu0 0.0
        %470 = vmatpush.msra.mxu0 %v412
        %471 = vmatmul.f32.gmra.mxu0 %v453
        %v472 = vpop.f32.mrf.mxu0
        %v473 = vadd.f32 %v449, %v472
        %474 = vdwg.mxu0
        %v475 = vadd.f32 %v446, %v473
        %v476 = vxor.u32 %v475, 2147483648
        %v477 = vmul.f32 %v476, 1.442695
        %v478 = vpow.pop %v477
        %v479 = vadd.f32 %v478, 1.0
        %v480 = vrcp.pop %v479
        %v481 = vmul.f32 %v479, %v480
        %v482 = vsub.f32 1.0, %v481
        %v483 = vmul.f32 %v480, %v482
        %v484 = vadd.f32 %v480, %v483
        %vm485 = vweird.f32 %v479
        %vm486 = vweird.f32 %v480
        %vm487 = vmor %vm485, %vm486
        %v488 = vsel %vm487, %v480, %v484
        %v489 = vand.u32 2147483647, %v479
        %vm490 = vcmp.eq.f32.partialorder %v489, 8.507059e+37
        %v491 = vand.u32 %v479, 2147483648
        %v492 = vor.u32 1.1754944e-38, %v491
        %v493 = vsel %vm490, %v492, %v488
        %v494 = vmul.f32 1.0, %v493
        %495 = vrot.lane.b32.xlu0 %v415, 8
        %v496 = vpop.permute.xlu0 %495
        %v498 = vmul.f32 %v494, %v496
        %500 = vrot.lane.b32.xlu0 %v498, 120
        %v501 = vpop.permute.xlu0 %500
        %v502 = vsel %vm451, %v501, 0
        %504 = vmatpush.msra.mxu0 0.0
        %505 = vmatpush.msra.mxu0 0.0
        %506 = vmatpush.msra.mxu0 0.0
        %507 = vmatpush.msra.mxu0 0.0
        %508 = vmatpush.msra.mxu0 0.0
        %509 = vmatpush.msra.mxu0 0.0
        %510 = vmatpush.msra.mxu0 0.0
        %511 = vmatpush.msra.mxu0 0.0
        %512 = vmatpush.msra.mxu0 0.0
        %513 = vmatpush.msra.mxu0 0.0
        %514 = vmatpush.msra.mxu0 0.0
        %515 = vmatpush.msra.mxu0 0.0
        %516 = vmatpush.msra.mxu0 0.0
        %517 = vmatpush.msra.mxu0 0.0
        %518 = vmatpush.msra.mxu0 0.0
        %519 = vmatpush.msra.mxu0 %v413
        %520 = vmatmul.f32.gmra.mxu0 %v502
        %v521 = vpop.f32.mrf.mxu0
        %v522 = vadd.f32 0.0, %v521
        %523 = vdwg.mxu0
        %525 = vrot.lane.b32.xlu0 %v522, 16
        %v526 = vpop.permute.xlu0 %525
        %v528 = vadd.f32 %v446, %v526
        %v529 = vadd.f32 %v528, %v449
        %v530 = vtanh.pop %v529
        %v531 = vmul.f32 %v494, %v415
        %v532 = vsub.f32 1.0, %v494
        %534 = vrot.lane.b32.xlu0 %v530, 112
        %v535 = vpop.permute.xlu0 %534
        %v537 = vmul.f32 %v532, %v535
        %v538 = vadd.f32 %v531, %v537
        %v539 = vmax.f32 %v538, -5.0
        %v540 = vmin.f32 %v539, 5.0
        %p541 = scmp.ne.s32.totalorder %s27, 1
        %s542 = scalar_select %p541, 1, 0
        %s543 = smul.u32 %s542, 2
        %s544 = scalar_lea.vmem [#allocation2], %s543
        %v545 = vld [vmem:[%s544] sm:$0x3]
        %v547 = vsel %vm420, %v545, 0
        %549 = vmatpush.msra.mxu0 0.0
        %550 = vmatpush.msra.mxu0 0.0
        %551 = vmatpush.msra.mxu0 0.0
        %552 = vmatpush.msra.mxu0 0.0
        %553 = vmatpush.msra.mxu0 0.0
        %554 = vmatpush.msra.mxu0 0.0
        %555 = vmatpush.msra.mxu0 0.0
        %556 = vmatpush.msra.mxu0 0.0
        %557 = vmatpush.msra.mxu0 0.0
        %558 = vmatpush.msra.mxu0 0.0
        %559 = vmatpush.msra.mxu0 0.0
        %560 = vmatpush.msra.mxu0 0.0
        %561 = vmatpush.msra.mxu0 0.0
        %562 = vmatpush.msra.mxu0 0.0
        %563 = vmatpush.msra.mxu0 0.0
        %564 = vmatpush.msra.mxu0 %v426
        %565 = vmatmul.f32.gmra.mxu0 %v547
        %v566 = vpop.f32.mrf.mxu0
        %v567 = vadd.f32 0.0, %v566
        %568 = vdwg.mxu0
        %v570 = vsel %vm451, %v540, 0
        %572 = vmatpush.msra.mxu0 0.0
        %573 = vmatpush.msra.mxu0 0.0
        %574 = vmatpush.msra.mxu0 0.0
        %575 = vmatpush.msra.mxu0 0.0
        %576 = vmatpush.msra.mxu0 0.0
        %577 = vmatpush.msra.mxu0 0.0
        %578 = vmatpush.msra.mxu0 0.0
        %579 = vmatpush.msra.mxu0 0.0
        %580 = vmatpush.msra.mxu0 0.0
        %581 = vmatpush.msra.mxu0 0.0
        %582 = vmatpush.msra.mxu0 0.0
        %583 = vmatpush.msra.mxu0 0.0
        %584 = vmatpush.msra.mxu0 0.0
        %585 = vmatpush.msra.mxu0 0.0
        %586 = vmatpush.msra.mxu0 0.0
        %587 = vmatpush.msra.mxu0 %v412
        %588 = vmatmul.f32.gmra.mxu0 %v570
        %v589 = vpop.f32.mrf.mxu0
        %v590 = vadd.f32 %v449, %v589
        %591 = vdwg.mxu0
        %v592 = vadd.f32 %v567, %v590
        %v593 = vxor.u32 %v592, 2147483648
        %v594 = vmul.f32 %v593, 1.442695
        %v595 = vpow.pop %v594
        %v596 = vadd.f32 %v595, 1.0
        %v597 = vrcp.pop %v596
        %v598 = vmul.f32 %v596, %v597
        %v599 = vsub.f32 1.0, %v598
        %v600 = vmul.f32 %v597, %v599
        %v601 = vadd.f32 %v597, %v600
        %vm602 = vweird.f32 %v596
        %vm603 = vweird.f32 %v597
        %vm604 = vmor %vm602, %vm603
        %v605 = vsel %vm604, %v597, %v601
        %v606 = vand.u32 2147483647, %v596
        %vm607 = vcmp.eq.f32.partialorder %v606, 8.507059e+37
        %v608 = vand.u32 %v596, 2147483648
        %v609 = vor.u32 1.1754944e-38, %v608
        %v610 = vsel %vm607, %v609, %v605
        %v611 = vmul.f32 1.0, %v610
        %612 = vrot.lane.b32.xlu0 %v540, 8
        %v613 = vpop.permute.xlu0 %612
        %v615 = vmul.f32 %v611, %v613
        %617 = vrot.lane.b32.xlu0 %v615, 120
        %v618 = vpop.permute.xlu0 %617
        %v619 = vsel %vm451, %v618, 0
        %621 = vmatpush.msra.mxu0 0.0
        %622 = vmatpush.msra.mxu0 0.0
        %623 = vmatpush.msra.mxu0 0.0
        %624 = vmatpush.msra.mxu0 0.0
        %625 = vmatpush.msra.mxu0 0.0
        %626 = vmatpush.msra.mxu0 0.0
        %627 = vmatpush.msra.mxu0 0.0
        %628 = vmatpush.msra.mxu0 0.0
        %629 = vmatpush.msra.mxu0 0.0
        %630 = vmatpush.msra.mxu0 0.0
        %631 = vmatpush.msra.mxu0 0.0
        %632 = vmatpush.msra.mxu0 0.0
        %633 = vmatpush.msra.mxu0 0.0
        %634 = vmatpush.msra.mxu0 0.0
        %635 = vmatpush.msra.mxu0 0.0
        %636 = vmatpush.msra.mxu0 %v413
        %637 = vmatmul.f32.gmra.mxu0 %v619
        %v638 = vpop.f32.mrf.mxu0
        %v639 = vadd.f32 0.0, %v638
        %640 = vdwg.mxu0
        %642 = vrot.lane.b32.xlu0 %v639, 16
        %v643 = vpop.permute.xlu0 %642
        %v645 = vadd.f32 %v567, %v643
        %v646 = vadd.f32 %v645, %v449
        %v647 = vtanh.pop %v646
        %v648 = vmul.f32 %v611, %v540
        %v649 = vsub.f32 1.0, %v611
        %651 = vrot.lane.b32.xlu0 %v647, 112
        %v652 = vpop.permute.xlu0 %651
        %v654 = vmul.f32 %v649, %v652
        %v655 = vadd.f32 %v648, %v654
        %v656 = vmax.f32 %v655, -5.0
        %v657 = vmin.f32 %v656, 5.0
        %vm658 = vcmask 58368
        %659 = vst.msk [vmem:[%s405] sm:$0x3] %vm658, %v657
        %s660 = sand.u32 %s186, 1
        %s661 = scalar_lea.sflag [#allocation4], %s660
        %s662 = sand.u32 %s186, 1
        %s663 = smul.addr %s662, 2
        %s664 = scalar_lea.vmem [#allocation11], %s663
        // Predicated region
        $region65: #{tpu_custom_call.1} parent=43 // pred_check
          %p665 = pneg %p196
        $region66: #{tpu_custom_call.1} parent=43 // pred_check_branch
          %667 = sbr.rel (%p665) target = $region68
        $region67: #{tpu_custom_call.1} parent=43 // pred_region
          %669 = vsyncadd %s661, 0
          %s670 = smul.addr %s27, 2
          %s671 = scalar_lea.hbm %s6, %s670
          %s673 = sshll.u32 %s664, 4
          %s674 = int_to_ptr.vmem [resolvable:$true] %s673
          %s675 = sshll.u32 %s671, 4
          %s676 = int_to_ptr.hbm [resolvable:$true] %s675
          %678 = dma.vmem_to_hbm [thread:$0]  %s674, 32, %s676, %s661
        $region68: #{tpu_custom_call.1} parent=43 // pred_fallthru
          _
      $region44: #{tpu_custom_call.1} parent=5 // pred_fallthru
        _
      %p679 = scmp.le.s32.totalorder 2, %s22
      // Predicated region
      $region69: #{tpu_custom_call.1} parent=5 // pred_check
        %p680 = pneg %p679
      $region70: #{tpu_custom_call.1} parent=5 // pred_check_branch
        %682 = sbr.rel (%p680) target = $region72
      $region71: #{tpu_custom_call.1} parent=5 // pred_region
        %s683 = ssub.s32 %s22, 2
        // Predicated region
        $region73: #{tpu_custom_call.1} parent=71 // pred_check
          %p684 = pneg %p202
        $region74: #{tpu_custom_call.1} parent=71 // pred_check_branch
          %686 = sbr.rel (%p684) target = $region76
        $region75: #{tpu_custom_call.1} parent=71 // pred_region
          %s687 = sand.u32 %s187, 1
          %s688 = scalar_lea.sflag [#allocation4], %s687
          %s689 = sand.u32 %s187, 1
          %s690 = smul.addr %s689, 2
          %s691 = scalar_lea.vmem [#allocation11], %s690
          %693 = dma.done %s688, 32
        $region76: #{tpu_custom_call.1} parent=71 // pred_fallthru
          _
      $region72: #{tpu_custom_call.1} parent=5 // pred_fallthru
        _
    $region6: #{tpu_custom_call.1} parent=1 // loop_footer
      %s26 = sadd.s32 1, %s22
    $region7: #{tpu_custom_call.1} parent=1 // loop_footer_branch
      %21 = sbr.rel target = $region3
    $region8: #{tpu_custom_call.1} parent=1 // loop_exit
      _
    %694 = vsyncpa [#allocation3], 1
    %s695 = scalar_lea.sflag [#allocation3], 1
    %696 = vsyncpa %s695, 1
    %697 = vsyncpa [#allocation6], 1
    %s698 = scalar_lea.sflag [#allocation6], 1
    %699 = vsyncpa %s698, 1
    %700 = vsyncpa [#allocation9], 1
    %s701 = scalar_lea.sflag [#allocation9], 1
    %702 = vsyncpa %s701, 1
    %703 = vsyncpa [#allocation4], 1
    %s704 = scalar_lea.sflag [#allocation4], 1
    %705 = vsyncpa %s704, 1

</llo_original>
